<compile_context>
chip_gen: v7x
topology: tpu7x:2x2x1
jax: 0.10.0
libtpu: 0.0.40
codegen_flags: <defaults>
</compile_context>

<pallas_src>
import functools

import jax
import jax.numpy as jnp
from jax.experimental import pallas as pl
from jax.experimental.pallas import tpu as pltpu


def _vmem_budget_bytes():
    """Per-generation VMEM budget (v5e/v6e: 128 MiB, v7x: 64 MiB physical)."""
    try:
        cap = pltpu.get_tpu_info().vmem_capacity_bytes
    except Exception:
        cap = 64 * 1024 * 1024
    # Leave headroom for compiler-internal scratch.
    return max(32 * 1024 * 1024, (cap * 3) // 4)


def _gather_logits(ids, table):
    """Exact embedding gather: one-hot(ids) @ table on the MXU.

    ids:   (tm, 1) int32
    table: (V, v_pad) float32, VMEM resident.
    One-hot weights are exactly 0/1, so with HIGHEST precision each output row
    is the table row reconstructed to f32 rounding — a true gather.
    """
    tm = ids.shape[0]
    v = table.shape[0]
    onehot = (ids == jax.lax.broadcasted_iota(jnp.int32, (tm, v), 1)
              ).astype(jnp.float32)
    return jax.lax.dot_general(
        onehot, table,
        dimension_numbers=(((1,), (0,)), ((), ())),
        precision=jax.lax.Precision.HIGHEST,
        preferred_element_type=jnp.float32)


def _bigram_logits_kernel(ids_ref, table_ref, logits_ref):
    """Inference path: gather only, no loss."""
    logits_ref[...] = _gather_logits(ids_ref[...], table_ref[...])


def _bigram_loss_kernel(ids_ref, tgt_ref, table_ref, logits_ref, loss_ref,
                        *, n_rows, tm):
    """Training path: gather + per-block partial cross-entropy sum."""
    i = pl.program_id(0)

    logits = _gather_logits(ids_ref[...], table_ref[...])     # (tm, v_pad) f32
    logits_ref[...] = logits
    v_pad = logits.shape[-1]

    # Row-wise logsumexp.  Padded vocab columns already hold -1e30 (set in the
    # wrapper), so no in-kernel column mask is needed; exp() underflows to 0.
    m = jnp.max(logits, axis=-1, keepdims=True)
    lse = m + jnp.log(jnp.sum(jnp.exp(logits - m), axis=-1, keepdims=True))

    cols = jax.lax.broadcasted_iota(jnp.int32, (tm, v_pad), 1)
    tgts = tgt_ref[...]                                        # (tm, 1) int32
    picked = jnp.sum(jnp.where(cols == tgts, logits, 0.0),
                     axis=-1, keepdims=True)                   # (tm, 1)

    # Mask padded tail rows (global row index >= true N) out of the loss.
    rows = i * tm + jax.lax.broadcasted_iota(jnp.int32, (tm, 1), 0)
    row_valid = (rows < n_rows).astype(jnp.float32)

    # Per-block partial loss -> reduced in the wrapper (keeps the row axis
    # fully parallel; no sequential scalar accumulator).
    loss_ref[...] = jnp.sum((lse - picked) * row_valid).reshape(1, 1, 1)


def bigram_forward(idx, table, targets=None, *, tm=256):
    """Pallas equivalent of BigramLanguageModel.forward.

    idx:     (B, T) integer token ids
    table:   (V, V) float embedding table (row = token id)
    targets: optional (B, T) integer targets

    Returns (logits, loss): logits (B, T, V) f32; loss scalar f32 or None.
    """
    B, T = idx.shape
    V = table.shape[0]
    N = B * T

    v_pad = pl.cdiv(V, 128) * 128            # lane-dense vocab dim
    budget = _vmem_budget_bytes()

    # Table is kept VMEM-resident (double-buffered by the pipeline).
    table_bytes = 2 * V * v_pad * 4
    # TODO(synk): for vocabularies whose (V, v_pad) table does not fit VMEM, a
    # double-buffered HBM DMA-gather path would be needed; the bigram table is
    # tiny so the resident path is always taken here.
    assert table_bytes < budget // 2, "embedding table too large for VMEM path"

    # Row tile: multiple of 8, no larger than the problem, fits the budget.
    tm = max(8, min(int(tm), pl.cdiv(N, 8) * 8))
    tm = (tm // 8) * 8
    while tm > 8 and table_bytes + 2 * tm * (v_pad + 2) * 4 > budget // 2:
        tm = max(8, ((tm // 2) // 8) * 8)

    n_pad = pl.cdiv(N, tm) * tm
    num_blocks = n_pad // tm

    # TODO(synk): in a real training loop, hoist this padded/cast table out of
    # the per-step forward (store the parameter already padded).
    table_p = jnp.pad(table.astype(jnp.float32), ((0, 0), (0, v_pad - V)),
                      constant_values=-1e30)
    ids = jnp.pad(idx.reshape(-1).astype(jnp.int32),
                  (0, n_pad - N)).reshape(n_pad, 1)

    table_spec = pl.BlockSpec((V, v_pad), lambda i: (0, 0))    # resident table
    ids_spec = pl.BlockSpec((tm, 1), lambda i: (i, 0))
    logits_spec = pl.BlockSpec((tm, v_pad), lambda i: (i, 0))
    cparams = pltpu.CompilerParams(
        dimension_semantics=("parallel",),   # independent row tiles (megacore)
        vmem_limit_bytes=budget,
    )

    if targets is None:
        logits_p = pl.pallas_call(
            _bigram_logits_kernel,
            out_shape=jax.ShapeDtypeStruct((n_pad, v_pad), jnp.float32),
            grid=(num_blocks,),
            in_specs=[ids_spec, table_spec],
            out_specs=logits_spec,
            compiler_params=cparams,
        )(ids, table_p)
        loss = None
    else:
        tgt2d = jnp.pad(targets.reshape(-1).astype(jnp.int32),
                        (0, n_pad - N)).reshape(n_pad, 1)
        kernel = functools.partial(_bigram_loss_kernel, n_rows=N, tm=tm)
        logits_p, loss_parts = pl.pallas_call(
            kernel,
            out_shape=(
                jax.ShapeDtypeStruct((n_pad, v_pad), jnp.float32),
                jax.ShapeDtypeStruct((num_blocks, 1, 1), jnp.float32),
            ),
            grid=(num_blocks,),
            in_specs=[ids_spec, ids_spec, table_spec],  # targets share ids_spec shape
            out_specs=(
                logits_spec,
                pl.BlockSpec((1, 1, 1), lambda i: (i, 0, 0)),
            ),
            compiler_params=cparams,
        )(ids, tgt2d, table_p)
        loss = jnp.sum(loss_parts) / jnp.float32(N)

    logits = logits_p[:N, :V].reshape(B, T, V)
    # NOTE: torch returns logits.view(B*T, C) when targets are given; we keep
    # (B, T, V) — same data, trivially reshapeable.
    return logits, loss


def _reference_forward(idx, table, targets):
    """Pure-JAX reference for correctness check."""
    logits = table[idx]                                   # (B, T, V)
    B, T, V = logits.shape
    lf = logits.reshape(B * T, V)
    tf = targets.reshape(-1)
    lse = jax.nn.logsumexp(lf, axis=-1)
    picked = jnp.take_along_axis(lf, tf[:, None], axis=-1)[:, 0]
    return logits, jnp.mean(lse - picked)


if __name__ == "__main__":
    key = jax.random.PRNGKey(0)
    k_tab, k_idx, k_tgt = jax.random.split(key, 3)

    vocab_size = 32      # V
    B, T = 2, 8          # batch, sequence length

    # nn.Embedding default init ~ N(0, 1), deterministic here.
    table = jax.random.normal(k_tab, (vocab_size, vocab_size), dtype=jnp.float32)
    idx = jax.random.randint(k_idx, (B, T), 0, vocab_size, dtype=jnp.int32)
    targets = jax.random.randint(k_tgt, (B, T), 0, vocab_size, dtype=jnp.int32)

    logits, loss = bigram_forward(idx, table, targets)      # training path
    logits_nt, loss_nt = bigram_forward(idx, table)         # inference path
    jax.block_until_ready((logits, loss, logits_nt))

    ref_logits, ref_loss = _reference_forward(idx, table, targets)
    assert logits.shape == (B, T, vocab_size)
    assert loss_nt is None
    assert jnp.allclose(logits, ref_logits, atol=1e-5, rtol=1e-5)
    assert jnp.allclose(logits_nt, ref_logits, atol=1e-5, rtol=1e-5)
    assert jnp.allclose(loss, ref_loss, atol=1e-5, rtol=1e-5)

    # TODO(synk): generate() uses torch.multinomial autoregressive sampling and
    # AdamW is optimizer state; neither is a forward-pass op, so they are not
    # expressed as Pallas kernels.
    print("KERNEL_OK")
</pallas_src>

<mosaic_0001>
module attributes {stable_mosaic.version = 11 : i64} {
  func.func @_bigram_loss_kernel(%arg0: i32, %arg1: memref<16x1xi32, #tpu.memory_space<vmem>>, %arg2: memref<16x1xi32, #tpu.memory_space<vmem>>, %arg3: memref<32x128xf32, #tpu.memory_space<vmem>>, %arg4: memref<16x128xf32, #tpu.memory_space<vmem>>, %arg5: memref<1x1x1xf32, #tpu.memory_space<vmem>>) attributes {dimension_semantics = [#tpu.dimension_semantics<parallel>], iteration_bounds = array<i64: 1>, scalar_prefetch = 0 : i64, scratch_operands = 0 : i64, tpu.core_type = #tpu.core_type<tc>, window_params = [{transform_indices = @transform_0, window_bounds = array<i64: 16, 1>}, {transform_indices = @transform_1, window_bounds = array<i64: 16, 1>}, {pipeline_mode = #tpu.pipeline_mode<synchronous>, transform_indices = @transform_2, window_bounds = array<i64: 32, 128>}, {transform_indices = @transform_3, window_bounds = array<i64: 16, 128>}, {transform_indices = @transform_4, window_bounds = array<i64: 1, 1, 1>}]} {
    %c0 = arith.constant 0 : index
    %c0_0 = arith.constant 0 : index
    %0 = vector.load %arg1[%c0, %c0_0] : memref<16x1xi32, #tpu.memory_space<vmem>>, vector<16x1xi32>
    %c0_1 = arith.constant 0 : index
    %c0_2 = arith.constant 0 : index
    %1 = vector.load %arg3[%c0_1, %c0_2] : memref<32x128xf32, #tpu.memory_space<vmem>>, vector<32x128xf32>
    %2 = tpu.iota {dimensions = array<i32: 1>} : vector<16x32xi32>
    %3 = vector.broadcast %0 : vector<16x1xi32> to vector<16x32xi32>
    %4 = arith.cmpi eq, %3, %2 : vector<16x32xi32>
    %5 = arith.extui %4 : vector<16x32xi1> to vector<16x32xi32>
    %6 = arith.sitofp %5 : vector<16x32xi32> to vector<16x32xf32>
    %cst = arith.constant dense<0.000000e+00> : vector<16x128xf32>
    %7 = tpu.matmul %6, %1, %cst {dimension_numbers = #tpu.dot_dimension_numbers<[1], [0], [0], [1], [0, 0, 1, 1], [], []>, precision = #tpu.contract_precision<fp32>} : vector<16x32xf32>, vector<32x128xf32>, vector<16x128xf32> -> vector<16x128xf32>
    %c0_3 = arith.constant 0 : index
    %c0_4 = arith.constant 0 : index
    %8 = vector.load %arg4[%c0_3, %c0_4] : memref<16x128xf32, #tpu.memory_space<vmem>>, vector<16x128xf32>
    tpu.vector_store %arg4[%c0_3, %c0_4], %7 {strides = array<i32>} : memref<16x128xf32, #tpu.memory_space<vmem>>, vector<16x128xf32>,
    %cst_5 = arith.constant dense<0xFF800000> : vector<16xf32>
    %9 = vector.multi_reduction <maximumf>, %7, %cst_5 [1] : vector<16x128xf32> to vector<16xf32>
    %10 = vector.shape_cast %9 : vector<16xf32> to vector<16x1xf32>
    %11 = vector.broadcast %10 : vector<16x1xf32> to vector<16x128xf32>
    %12 = arith.subf %7, %11 : vector<16x128xf32>
    %13 = math.exp %12 : vector<16x128xf32>
    %cst_6 = arith.constant dense<0.000000e+00> : vector<16xf32>
    %14 = vector.multi_reduction <add>, %13, %cst_6 [1] : vector<16x128xf32> to vector<16xf32>
    %15 = vector.shape_cast %14 : vector<16xf32> to vector<16x1xf32>
    %16 = math.log %15 : vector<16x1xf32>
    %17 = arith.addf %10, %16 : vector<16x1xf32>
    %18 = tpu.iota {dimensions = array<i32: 1>} : vector<16x128xi32>
    %c0_7 = arith.constant 0 : index
    %c0_8 = arith.constant 0 : index
    %19 = vector.load %arg2[%c0_7, %c0_8] : memref<16x1xi32, #tpu.memory_space<vmem>>, vector<16x1xi32>
    %20 = vector.broadcast %19 : vector<16x1xi32> to vector<16x128xi32>
    %21 = arith.cmpi eq, %18, %20 : vector<16x128xi32>
    %cst_9 = arith.constant 0.000000e+00 : f32
    %22 = vector.broadcast %cst_9 : f32 to vector<16x128xf32>
    %23 = arith.select %21, %7, %22 : vector<16x128xi1>, vector<16x128xf32>
    %cst_10 = arith.constant dense<0.000000e+00> : vector<16xf32>
    %24 = vector.multi_reduction <add>, %23, %cst_10 [1] : vector<16x128xf32> to vector<16xf32>
    %25 = vector.shape_cast %24 : vector<16xf32> to vector<16x1xf32>
    %c16_i32 = arith.constant 16 : i32
    %26 = arith.muli %arg0, %c16_i32 : i32
    %27 = tpu.iota {dimensions = array<i32: 0>} : vector<16x1xi32>
    %28 = vector.broadcast %26 : i32 to vector<16x1xi32>
    %29 = arith.addi %28, %27 : vector<16x1xi32>
    %c16_i32_11 = arith.constant 16 : i32
    %30 = vector.broadcast %c16_i32_11 : i32 to vector<16x1xi32>
    %31 = arith.cmpi slt, %29, %30 : vector<16x1xi32>
    %32 = arith.extui %31 : vector<16x1xi1> to vector<16x1xi32>
    %33 = arith.sitofp %32 : vector<16x1xi32> to vector<16x1xf32>
    %34 = arith.subf %17, %25 : vector<16x1xf32>
    %35 = arith.mulf %34, %33 : vector<16x1xf32>
    %36 = vector.shape_cast %35 : vector<16x1xf32> to vector<1x16x1xf32>
    %cst_12 = arith.constant dense<0.000000e+00> : vector<1xf32>
    %37 = vector.multi_reduction <add>, %36, %cst_12 [1, 2] : vector<1x16x1xf32> to vector<1xf32>
    %38 = vector.shape_cast %37 : vector<1xf32> to vector<1x1x1xf32>
    %39 = vector.extract %38[0, 0, 0] : f32 from vector<1x1x1xf32>
    %40 = vector.broadcast %39 : f32 to vector<1x1x1xf32>
    %c0_13 = arith.constant 0 : index
    %c0_14 = arith.constant 0 : index
    %c0_15 = arith.constant 0 : index
    %41 = vector.load %arg5[%c0_13, %c0_14, %c0_15] : memref<1x1x1xf32, #tpu.memory_space<vmem>>, vector<1x1x1xf32>
    tpu.vector_store %arg5[%c0_13, %c0_14, %c0_15], %40 {strides = array<i32>} : memref<1x1x1xf32, #tpu.memory_space<vmem>>, vector<1x1x1xf32>,
    return
  }
  func.func @transform_0(%arg0: i32) -> (i32, i32) {
    %c0_i32 = arith.constant 0 : i32
    %c0_i32_0 = arith.constant 0 : i32
    return %arg0, %c0_i32 : i32, i32
  }
  func.func @transform_1(%arg0: i32) -> (i32, i32) {
    %c0_i32 = arith.constant 0 : i32
    %c0_i32_0 = arith.constant 0 : i32
    return %arg0, %c0_i32 : i32, i32
  }
  func.func @transform_2(%arg0: i32) -> (i32, i32) {
    %c0_i32 = arith.constant 0 : i32
    %c0_i32_0 = arith.constant 0 : i32
    %c0_i32_1 = arith.constant 0 : i32
    return %c0_i32, %c0_i32_0 : i32, i32
  }
  func.func @transform_3(%arg0: i32) -> (i32, i32) {
    %c0_i32 = arith.constant 0 : i32
    %c0_i32_0 = arith.constant 0 : i32
    return %arg0, %c0_i32 : i32, i32
  }
  func.func @transform_4(%arg0: i32) -> (i32, i32, i32) {
    %c0_i32 = arith.constant 0 : i32
    %c0_i32_0 = arith.constant 0 : i32
    %c0_i32_1 = arith.constant 0 : i32
    return %arg0, %c0_i32, %c0_i32_0 : i32, i32, i32
  }
}

</mosaic_0001>

<llo_original>
// kernel: tpu_custom_call.1
$region0: #{tpu_custom_call.1}
  #allocation0 [shape = 'u32[]', space=smem, size = 0x4, offset = 0x4, fixed_abs, tag = 'smem constant byte address 0x4 - core index']
  #allocation1 [shape = 'u32[144,128]{1,0:T(1,128)}', space=vmem, size = 0x12000, scoped, tag = 'internal scratch']
  %s0 = inlined_call_operand.vmem [shape: s32[16,1], index: 0, kind: input, shape index: {}]
  %s1 = inlined_call_operand.vmem [shape: s32[16,1], index: 1, kind: input, shape index: {}]
  %s2 = inlined_call_operand.vmem [shape: f32[32,128], index: 2, kind: input, shape index: {}]
  %s3 = inlined_call_operand.hbm [shape: f32[16,128], index: 3, kind: output, shape index: {0}]
  %s4 = inlined_call_operand.hbm [shape: f32[1,1,1], index: 4, kind: output, shape index: {1}]
  %5 = xla_tuple %s3, %s4
  %s6 = sld [smem:[#allocation0]]
  $region30: #{tpu_custom_call.1} parent=0
    _
  %s8 = ssub.s32 1, %s6
  %s9 = scalar_select 0, %s8, %s6
  $region1: #{tpu_custom_call.1} parent=0
    #allocation2 [shape = 'u8[8192]{0}', space=vmem, size = 0x2000, scoped, tag = 'output window, operand 0, single buffered']
    #allocation3 [shape = 's32[1]{0}', space=sflag, size = 0x4, scoped, tag = 'scoped memory for tpu_custom_call.1']
    #allocation4 [shape = 'u8[512]{0}', space=vmem, size = 0x400, scoped, tag = 'output window, operand 1, single buffered']
    #allocation5 [shape = 's32[1]{0}', space=sflag, size = 0x4, scoped, tag = 'scoped memory for tpu_custom_call.1']
    %10 = vsyncpa [#allocation3], 0
    %11 = vsyncpa [#allocation5], 0
    // Predicated region
    $region2: #{tpu_custom_call.1} parent=1 // pred_check
      _
    $region3: #{tpu_custom_call.1} parent=1 // pred_check_branch
      %13 = sbr.rel (0) target = $region5
    $region4: #{tpu_custom_call.1} parent=1 // pred_region
      _
    $region5: #{tpu_custom_call.1} parent=1 // pred_fallthru
      _
    // Predicated region
    $region6: #{tpu_custom_call.1} parent=1 // pred_check
      _
    $region7: #{tpu_custom_call.1} parent=1 // pred_check_branch
      %15 = sbr.rel (0) target = $region9
    $region8: #{tpu_custom_call.1} parent=1 // pred_region
      _
    $region9: #{tpu_custom_call.1} parent=1 // pred_fallthru
      _
    // Predicated region
    $region10: #{tpu_custom_call.1} parent=1 // pred_check
      _
    $region11: #{tpu_custom_call.1} parent=1 // pred_check_branch
      %17 = sbr.rel (0) target = $region13
    $region12: #{tpu_custom_call.1} parent=1 // pred_region
      _
    $region13: #{tpu_custom_call.1} parent=1 // pred_fallthru
      _
    %v18 = vld [vmem:[%s0] sm:$0xff]
    %v19 = vld [vmem:[%s0 + $0x8] sm:$0xff]
    %v20 = vld [vmem:[%s2] sm:$0xff]
    %v21 = vld [vmem:[%s2 + $0x8] sm:$0xff]
    %v22 = vld [vmem:[%s2 + $0x10] sm:$0xff]
    %v23 = vld [vmem:[%s2 + $0x18] sm:$0xff]
    %v24 = vlaneseq
    %v25 = vand.u32 %v24, 127
    %26 = vset.pattern.permute.xlu0 0
    %27 = vperm.xlu0 %26, %v18
    %v28 = vpop.permute.xlu0 %27
    %29 = vset.pattern.permute.xlu0 0
    %30 = vperm.xlu0 %29, %v19
    %v31 = vpop.permute.xlu0 %30
    %vm32 = vcmp.eq.s32.totalorder %v28, %v25
    %vm33 = vcmp.eq.s32.totalorder %v31, %v25
    %v34 = vsel %vm32, 1, 0
    %v35 = vsel %vm33, 1, 0
    %v36 = vcvt.s32.f32 %v34
    %v37 = vcvt.s32.f32 %v35
    %vm38 = vcmask 261120
    %v40 = vsel %vm38, %v36, 0
    %v43 = vsel %vm38, %v37, 0
    %45 = vmatprep.subr.mxu0 0.0
    %v46 = vand.u32 %v20, 4294901760
    %47 = vmatpush1.msra.mxu0 %v46
    %48 = vmatprep.subr.mxu0 0.0
    %v49 = vand.u32 %v21, 4294901760
    %50 = vmatpush1.msra.mxu0 %v49
    %51 = vmatprep.subr.mxu0 0.0
    %v52 = vand.u32 %v22, 4294901760
    %53 = vmatpush1.msra.mxu0 %v52
    %54 = vmatprep.subr.mxu0 0.0
    %v55 = vand.u32 %v23, 4294901760
    %56 = vmatpush1.msra.mxu0 %v55
    %57 = vmatprep.subr.mxu0 0.0
    %58 = vmatpush1.msra.mxu0 0.0
    %59 = vmatprep.subr.mxu0 0.0
    %60 = vmatpush1.msra.mxu0 0.0
    %61 = vmatprep.subr.mxu0 0.0
    %62 = vmatpush1.msra.mxu0 0.0
    %63 = vmatprep.subr.mxu0 0.0
    %64 = vmatpush1.msra.mxu0 0.0
    %65 = vmatprep.subr.mxu0 0.0
    %66 = vmatpush1.msra.mxu0 0.0
    %67 = vmatprep.subr.mxu0 0.0
    %68 = vmatpush1.msra.mxu0 0.0
    %69 = vmatprep.subr.mxu0 0.0
    %70 = vmatpush1.msra.mxu0 0.0
    %71 = vmatprep.subr.mxu0 0.0
    %72 = vmatpush1.msra.mxu0 0.0
    %73 = vmatprep.subr.mxu0 0.0
    %74 = vmatpush1.msra.mxu0 0.0
    %75 = vmatprep.subr.mxu0 0.0
    %76 = vmatpush1.msra.mxu0 0.0
    %77 = vmatprep.subr.mxu0 0.0
    %78 = vmatpush1.msra.mxu0 0.0
    %79 = vmatprep.subr.mxu0 0.0
    %80 = vmatpush1.msra.mxu0 0.0
    %81 = vmatprep.subr.mxu0 0.0
    %82 = vmatpush1.msra.mxu0 0.0
    %83 = vmatprep.subr.mxu0 0.0
    %84 = vmatpush1.msra.mxu0 0.0
    %85 = vmatprep.subr.mxu0 0.0
    %86 = vmatpush1.msra.mxu0 0.0
    %87 = vmatprep.subr.mxu0 0.0
    %88 = vmatpush1.msra.mxu0 0.0
    %89 = vmatprep.subr.mxu0 0.0
    %90 = vmatpush1.msra.mxu0 0.0
    %91 = vmatprep.subr.mxu0 0.0
    %92 = vmatpush1.msra.mxu0 0.0
    %93 = vmatprep.subr.mxu0 0.0
    %94 = vmatpush1.msra.mxu0 0.0
    %95 = vmatprep.subr.mxu0 0.0
    %96 = vmatpush1.msra.mxu0 0.0
    %97 = vmatprep.subr.mxu0 0.0
    %98 = vmatpush1.msra.mxu0 0.0
    %99 = vmatprep.subr.mxu0 0.0
    %100 = vmatpush1.msra.mxu0 0.0
    %101 = vmatprep.subr.mxu0 0.0
    %102 = vmatpush1.msra.mxu0 0.0
    %103 = vmatprep.subr.mxu0 0.0
    %104 = vmatpush1.msra.mxu0 0.0
    %105 = vmatprep.subr.mxu0 0.0
    %106 = vmatpush1.msra.mxu0 0.0
    %107 = vmatprep.subr.mxu0 0.0
    %108 = vmatpush1.msra.mxu0 0.0
    %109 = vmatprep.subr.mxu0 0.0
    %110 = vmatpush1.msra.mxu0 0.0
    %111 = vmatprep.subr.mxu0 0.0
    %112 = vmatpush1.msra.mxu0 0.0
    %113 = vmatprep.mubr.f32.mxu0 0.0
    %v114 = vand.u32 %v40, 4294901760
    %v115 = vsub.f32 %v40, %v114
    %v116 = vand.u32 %v115, 4294901760
    %v117 = vsub.f32 %v115, %v116
    %v118 = vand.u32 %v117, 4294901760
    %119 = vmatmul.mubr.f32.gmra.mrb[0].mxu0 %v118
    %v120 = vpop.f32.mrb[0].mxu0
    %v121 = vadd.f32 0.0, %v120
    %v122 = vpop.f32.mrb[0].mxu0
    %123 = vmatprep.mubr.f32.mxu0 0.0
    %v124 = vand.u32 %v43, 4294901760
    %v125 = vsub.f32 %v43, %v124
    %v126 = vand.u32 %v125, 4294901760
    %v127 = vsub.f32 %v125, %v126
    %v128 = vand.u32 %v127, 4294901760
    %129 = vmatmul.mubr.f32.gmra.mrb[0].mxu0 %v128
    %v130 = vpop.f32.mrb[0].mxu0
    %v131 = vadd.f32 0.0, %v130
    %v132 = vpop.f32.mrb[0].mxu0
    %133 = vdwg.mxu0
    %134 = vmatprep.subr.mxu0 0.0
    %v135 = vand.u32 %v20, 4294901760
    %v136 = vsub.f32 %v20, %v135
    %v137 = vand.u32 %v136, 4294901760
    %v138 = vsub.f32 %v136, %v137
    %v139 = vand.u32 %v138, 4294901760
    %140 = vmatpush1.msra.mxu0 %v139
    %141 = vmatprep.subr.mxu0 0.0
    %v142 = vand.u32 %v21, 4294901760
    %v143 = vsub.f32 %v21, %v142
    %v144 = vand.u32 %v143, 4294901760
    %v145 = vsub.f32 %v143, %v144
    %v146 = vand.u32 %v145, 4294901760
    %147 = vmatpush1.msra.mxu0 %v146
    %148 = vmatprep.subr.mxu0 0.0
    %v149 = vand.u32 %v22, 4294901760
    %v150 = vsub.f32 %v22, %v149
    %v151 = vand.u32 %v150, 4294901760
    %v152 = vsub.f32 %v150, %v151
    %v153 = vand.u32 %v152, 4294901760
    %154 = vmatpush1.msra.mxu0 %v153
    %155 = vmatprep.subr.mxu0 0.0
    %v156 = vand.u32 %v23, 4294901760
    %v157 = vsub.f32 %v23, %v156
    %v158 = vand.u32 %v157, 4294901760
    %v159 = vsub.f32 %v157, %v158
    %v160 = vand.u32 %v159, 4294901760
    %161 = vmatpush1.msra.mxu0 %v160
    %162 = vmatprep.subr.mxu0 0.0
    %163 = vmatpush1.msra.mxu0 0.0
    %164 = vmatprep.subr.mxu0 0.0
    %165 = vmatpush1.msra.mxu0 0.0
    %166 = vmatprep.subr.mxu0 0.0
    %167 = vmatpush1.msra.mxu0 0.0
    %168 = vmatprep.subr.mxu0 0.0
    %169 = vmatpush1.msra.mxu0 0.0
    %170 = vmatprep.subr.mxu0 0.0
    %171 = vmatpush1.msra.mxu0 0.0
    %172 = vmatprep.subr.mxu0 0.0
    %173 = vmatpush1.msra.mxu0 0.0
    %174 = vmatprep.subr.mxu0 0.0
    %175 = vmatpush1.msra.mxu0 0.0
    %176 = vmatprep.subr.mxu0 0.0
    %177 = vmatpush1.msra.mxu0 0.0
    %178 = vmatprep.subr.mxu0 0.0
    %179 = vmatpush1.msra.mxu0 0.0
    %180 = vmatprep.subr.mxu0 0.0
    %181 = vmatpush1.msra.mxu0 0.0
    %182 = vmatprep.subr.mxu0 0.0
    %183 = vmatpush1.msra.mxu0 0.0
    %184 = vmatprep.subr.mxu0 0.0
    %185 = vmatpush1.msra.mxu0 0.0
    %186 = vmatprep.subr.mxu0 0.0
    %187 = vmatpush1.msra.mxu0 0.0
    %188 = vmatprep.subr.mxu0 0.0
    %189 = vmatpush1.msra.mxu0 0.0
    %190 = vmatprep.subr.mxu0 0.0
    %191 = vmatpush1.msra.mxu0 0.0
    %192 = vmatprep.subr.mxu0 0.0
    %193 = vmatpush1.msra.mxu0 0.0
    %194 = vmatprep.subr.mxu0 0.0
    %195 = vmatpush1.msra.mxu0 0.0
    %196 = vmatprep.subr.mxu0 0.0
    %197 = vmatpush1.msra.mxu0 0.0
    %198 = vmatprep.subr.mxu0 0.0
    %199 = vmatpush1.msra.mxu0 0.0
    %200 = vmatprep.subr.mxu0 0.0
    %201 = vmatpush1.msra.mxu0 0.0
    %202 = vmatprep.subr.mxu0 0.0
    %203 = vmatpush1.msra.mxu0 0.0
    %204 = vmatprep.subr.mxu0 0.0
    %205 = vmatpush1.msra.mxu0 0.0
    %206 = vmatprep.subr.mxu0 0.0
    %207 = vmatpush1.msra.mxu0 0.0
    %208 = vmatprep.subr.mxu0 0.0
    %209 = vmatpush1.msra.mxu0 0.0
    %210 = vmatprep.subr.mxu0 0.0
    %211 = vmatpush1.msra.mxu0 0.0
    %212 = vmatprep.subr.mxu0 0.0
    %213 = vmatpush1.msra.mxu0 0.0
    %214 = vmatprep.subr.mxu0 0.0
    %215 = vmatpush1.msra.mxu0 0.0
    %216 = vmatprep.subr.mxu0 0.0
    %217 = vmatpush1.msra.mxu0 0.0
    %218 = vmatprep.mubr.f32.mxu0 0.0
    %v219 = vand.u32 %v40, 4294901760
    %220 = vmatmul.mubr.f32.gmra.mrb[0].mxu0 %v219
    %v221 = vpop.f32.mrb[0].mxu0
    %v222 = vadd.f32 %v121, %v221
    %v223 = vpop.f32.mrb[0].mxu0
    %224 = vmatprep.mubr.f32.mxu0 0.0
    %v225 = vand.u32 %v43, 4294901760
    %226 = vmatmul.mubr.f32.gmra.mrb[0].mxu0 %v225
    %v227 = vpop.f32.mrb[0].mxu0
    %v228 = vadd.f32 %v131, %v227
    %v229 = vpop.f32.mrb[0].mxu0
    %230 = vdwg.mxu0
    %231 = vmatprep.subr.mxu0 0.0
    %v232 = vand.u32 %v20, 4294901760
    %v233 = vsub.f32 %v20, %v232
    %234 = vmatpush1.msra.mxu0 %v233
    %235 = vmatprep.subr.mxu0 0.0
    %v236 = vand.u32 %v21, 4294901760
    %v237 = vsub.f32 %v21, %v236
    %238 = vmatpush1.msra.mxu0 %v237
    %239 = vmatprep.subr.mxu0 0.0
    %v240 = vand.u32 %v22, 4294901760
    %v241 = vsub.f32 %v22, %v240
    %242 = vmatpush1.msra.mxu0 %v241
    %243 = vmatprep.subr.mxu0 0.0
    %v244 = vand.u32 %v23, 4294901760
    %v245 = vsub.f32 %v23, %v244
    %246 = vmatpush1.msra.mxu0 %v245
    %247 = vmatprep.subr.mxu0 0.0
    %248 = vmatpush1.msra.mxu0 0.0
    %249 = vmatprep.subr.mxu0 0.0
    %250 = vmatpush1.msra.mxu0 0.0
    %251 = vmatprep.subr.mxu0 0.0
    %252 = vmatpush1.msra.mxu0 0.0
    %253 = vmatprep.subr.mxu0 0.0
    %254 = vmatpush1.msra.mxu0 0.0
    %255 = vmatprep.subr.mxu0 0.0
    %256 = vmatpush1.msra.mxu0 0.0
    %257 = vmatprep.subr.mxu0 0.0
    %258 = vmatpush1.msra.mxu0 0.0
    %259 = vmatprep.subr.mxu0 0.0
    %260 = vmatpush1.msra.mxu0 0.0
    %261 = vmatprep.subr.mxu0 0.0
    %262 = vmatpush1.msra.mxu0 0.0
    %263 = vmatprep.subr.mxu0 0.0
    %264 = vmatpush1.msra.mxu0 0.0
    %265 = vmatprep.subr.mxu0 0.0
    %266 = vmatpush1.msra.mxu0 0.0
    %267 = vmatprep.subr.mxu0 0.0
    %268 = vmatpush1.msra.mxu0 0.0
    %269 = vmatprep.subr.mxu0 0.0
    %270 = vmatpush1.msra.mxu0 0.0
    %271 = vmatprep.subr.mxu0 0.0
    %272 = vmatpush1.msra.mxu0 0.0
    %273 = vmatprep.subr.mxu0 0.0
    %274 = vmatpush1.msra.mxu0 0.0
    %275 = vmatprep.subr.mxu0 0.0
    %276 = vmatpush1.msra.mxu0 0.0
    %277 = vmatprep.subr.mxu0 0.0
    %278 = vmatpush1.msra.mxu0 0.0
    %279 = vmatprep.subr.mxu0 0.0
    %280 = vmatpush1.msra.mxu0 0.0
    %281 = vmatprep.subr.mxu0 0.0
    %282 = vmatpush1.msra.mxu0 0.0
    %283 = vmatprep.subr.mxu0 0.0
    %284 = vmatpush1.msra.mxu0 0.0
    %285 = vmatprep.subr.mxu0 0.0
    %286 = vmatpush1.msra.mxu0 0.0
    %287 = vmatprep.subr.mxu0 0.0
    %288 = vmatpush1.msra.mxu0 0.0
    %289 = vmatprep.subr.mxu0 0.0
    %290 = vmatpush1.msra.mxu0 0.0
    %291 = vmatprep.subr.mxu0 0.0
    %292 = vmatpush1.msra.mxu0 0.0
    %293 = vmatprep.subr.mxu0 0.0
    %294 = vmatpush1.msra.mxu0 0.0
    %295 = vmatprep.subr.mxu0 0.0
    %296 = vmatpush1.msra.mxu0 0.0
    %297 = vmatprep.subr.mxu0 0.0
    %298 = vmatpush1.msra.mxu0 0.0
    %299 = vmatprep.subr.mxu0 0.0
    %300 = vmatpush1.msra.mxu0 0.0
    %301 = vmatprep.subr.mxu0 0.0
    %302 = vmatpush1.msra.mxu0 0.0
    %303 = vmatprep.mubr.f32.mxu0 0.0
    %v304 = vand.u32 %v40, 4294901760
    %v305 = vsub.f32 %v40, %v304
    %306 = vmatmul.mubr.f32.gmra.mrb[0].mxu0 %v305
    %v307 = vpop.f32.mrb[0].mxu0
    %v308 = vadd.f32 %v222, %v307
    %v309 = vpop.f32.mrb[0].mxu0
    %310 = vmatprep.mubr.f32.mxu0 0.0
    %v311 = vand.u32 %v43, 4294901760
    %v312 = vsub.f32 %v43, %v311
    %313 = vmatmul.mubr.f32.gmra.mrb[0].mxu0 %v312
    %v314 = vpop.f32.mrb[0].mxu0
    %v315 = vadd.f32 %v228, %v314
    %v316 = vpop.f32.mrb[0].mxu0
    %317 = vdwg.mxu0
    %318 = vmatprep.subr.mxu0 0.0
    %v319 = vand.u32 %v20, 4294901760
    %320 = vmatpush1.msra.mxu0 %v319
    %321 = vmatprep.subr.mxu0 0.0
    %v322 = vand.u32 %v21, 4294901760
    %323 = vmatpush1.msra.mxu0 %v322
    %324 = vmatprep.subr.mxu0 0.0
    %v325 = vand.u32 %v22, 4294901760
    %326 = vmatpush1.msra.mxu0 %v325
    %327 = vmatprep.subr.mxu0 0.0
    %v328 = vand.u32 %v23, 4294901760
    %329 = vmatpush1.msra.mxu0 %v328
    %330 = vmatprep.subr.mxu0 0.0
    %331 = vmatpush1.msra.mxu0 0.0
    %332 = vmatprep.subr.mxu0 0.0
    %333 = vmatpush1.msra.mxu0 0.0
    %334 = vmatprep.subr.mxu0 0.0
    %335 = vmatpush1.msra.mxu0 0.0
    %336 = vmatprep.subr.mxu0 0.0
    %337 = vmatpush1.msra.mxu0 0.0
    %338 = vmatprep.subr.mxu0 0.0
    %339 = vmatpush1.msra.mxu0 0.0
    %340 = vmatprep.subr.mxu0 0.0
    %341 = vmatpush1.msra.mxu0 0.0
    %342 = vmatprep.subr.mxu0 0.0
    %343 = vmatpush1.msra.mxu0 0.0
    %344 = vmatprep.subr.mxu0 0.0
    %345 = vmatpush1.msra.mxu0 0.0
    %346 = vmatprep.subr.mxu0 0.0
    %347 = vmatpush1.msra.mxu0 0.0
    %348 = vmatprep.subr.mxu0 0.0
    %349 = vmatpush1.msra.mxu0 0.0
    %350 = vmatprep.subr.mxu0 0.0
    %351 = vmatpush1.msra.mxu0 0.0
    %352 = vmatprep.subr.mxu0 0.0
    %353 = vmatpush1.msra.mxu0 0.0
    %354 = vmatprep.subr.mxu0 0.0
    %355 = vmatpush1.msra.mxu0 0.0
    %356 = vmatprep.subr.mxu0 0.0
    %357 = vmatpush1.msra.mxu0 0.0
    %358 = vmatprep.subr.mxu0 0.0
    %359 = vmatpush1.msra.mxu0 0.0
    %360 = vmatprep.subr.mxu0 0.0
    %361 = vmatpush1.msra.mxu0 0.0
    %362 = vmatprep.subr.mxu0 0.0
    %363 = vmatpush1.msra.mxu0 0.0
    %364 = vmatprep.subr.mxu0 0.0
    %365 = vmatpush1.msra.mxu0 0.0
    %366 = vmatprep.subr.mxu0 0.0
    %367 = vmatpush1.msra.mxu0 0.0
    %368 = vmatprep.subr.mxu0 0.0
    %369 = vmatpush1.msra.mxu0 0.0
    %370 = vmatprep.subr.mxu0 0.0
    %371 = vmatpush1.msra.mxu0 0.0
    %372 = vmatprep.subr.mxu0 0.0
    %373 = vmatpush1.msra.mxu0 0.0
    %374 = vmatprep.subr.mxu0 0.0
    %375 = vmatpush1.msra.mxu0 0.0
    %376 = vmatprep.subr.mxu0 0.0
    %377 = vmatpush1.msra.mxu0 0.0
    %378 = vmatprep.subr.mxu0 0.0
    %379 = vmatpush1.msra.mxu0 0.0
    %380 = vmatprep.subr.mxu0 0.0
    %381 = vmatpush1.msra.mxu0 0.0
    %382 = vmatprep.subr.mxu0 0.0
    %383 = vmatpush1.msra.mxu0 0.0
    %384 = vmatprep.subr.mxu0 0.0
    %385 = vmatpush1.msra.mxu0 0.0
    %386 = vmatprep.mubr.f32.mxu0 0.0
    %v387 = vand.u32 %v40, 4294901760
    %v388 = vsub.f32 %v40, %v387
    %v389 = vand.u32 %v388, 4294901760
    %390 = vmatmul.mubr.f32.gmra.mrb[0].mxu0 %v389
    %v391 = vpop.f32.mrb[0].mxu0
    %v392 = vadd.f32 %v308, %v391
    %v393 = vpop.f32.mrb[0].mxu0
    %394 = vmatprep.mubr.f32.mxu0 0.0
    %v395 = vand.u32 %v43, 4294901760
    %v396 = vsub.f32 %v43, %v395
    %v397 = vand.u32 %v396, 4294901760
    %398 = vmatmul.mubr.f32.gmra.mrb[0].mxu0 %v397
    %v399 = vpop.f32.mrb[0].mxu0
    %v400 = vadd.f32 %v315, %v399
    %v401 = vpop.f32.mrb[0].mxu0
    %402 = vdwg.mxu0
    %403 = vmatprep.subr.mxu0 0.0
    %v404 = vand.u32 %v20, 4294901760
    %v405 = vsub.f32 %v20, %v404
    %v406 = vand.u32 %v405, 4294901760
    %407 = vmatpush1.msra.mxu0 %v406
    %408 = vmatprep.subr.mxu0 0.0
    %v409 = vand.u32 %v21, 4294901760
    %v410 = vsub.f32 %v21, %v409
    %v411 = vand.u32 %v410, 4294901760
    %412 = vmatpush1.msra.mxu0 %v411
    %413 = vmatprep.subr.mxu0 0.0
    %v414 = vand.u32 %v22, 4294901760
    %v415 = vsub.f32 %v22, %v414
    %v416 = vand.u32 %v415, 4294901760
    %417 = vmatpush1.msra.mxu0 %v416
    %418 = vmatprep.subr.mxu0 0.0
    %v419 = vand.u32 %v23, 4294901760
    %v420 = vsub.f32 %v23, %v419
    %v421 = vand.u32 %v420, 4294901760
    %422 = vmatpush1.msra.mxu0 %v421
    %423 = vmatprep.subr.mxu0 0.0
    %424 = vmatpush1.msra.mxu0 0.0
    %425 = vmatprep.subr.mxu0 0.0
    %426 = vmatpush1.msra.mxu0 0.0
    %427 = vmatprep.subr.mxu0 0.0
    %428 = vmatpush1.msra.mxu0 0.0
    %429 = vmatprep.subr.mxu0 0.0
    %430 = vmatpush1.msra.mxu0 0.0
    %431 = vmatprep.subr.mxu0 0.0
    %432 = vmatpush1.msra.mxu0 0.0
    %433 = vmatprep.subr.mxu0 0.0
    %434 = vmatpush1.msra.mxu0 0.0
    %435 = vmatprep.subr.mxu0 0.0
    %436 = vmatpush1.msra.mxu0 0.0
    %437 = vmatprep.subr.mxu0 0.0
    %438 = vmatpush1.msra.mxu0 0.0
    %439 = vmatprep.subr.mxu0 0.0
    %440 = vmatpush1.msra.mxu0 0.0
    %441 = vmatprep.subr.mxu0 0.0
    %442 = vmatpush1.msra.mxu0 0.0
    %443 = vmatprep.subr.mxu0 0.0
    %444 = vmatpush1.msra.mxu0 0.0
    %445 = vmatprep.subr.mxu0 0.0
    %446 = vmatpush1.msra.mxu0 0.0
    %447 = vmatprep.subr.mxu0 0.0
    %448 = vmatpush1.msra.mxu0 0.0
    %449 = vmatprep.subr.mxu0 0.0
    %450 = vmatpush1.msra.mxu0 0.0
    %451 = vmatprep.subr.mxu0 0.0
    %452 = vmatpush1.msra.mxu0 0.0
    %453 = vmatprep.subr.mxu0 0.0
    %454 = vmatpush1.msra.mxu0 0.0
    %455 = vmatprep.subr.mxu0 0.0
    %456 = vmatpush1.msra.mxu0 0.0
    %457 = vmatprep.subr.mxu0 0.0
    %458 = vmatpush1.msra.mxu0 0.0
    %459 = vmatprep.subr.mxu0 0.0
    %460 = vmatpush1.msra.mxu0 0.0
    %461 = vmatprep.subr.mxu0 0.0
    %462 = vmatpush1.msra.mxu0 0.0
    %463 = vmatprep.subr.mxu0 0.0
    %464 = vmatpush1.msra.mxu0 0.0
    %465 = vmatprep.subr.mxu0 0.0
    %466 = vmatpush1.msra.mxu0 0.0
    %467 = vmatprep.subr.mxu0 0.0
    %468 = vmatpush1.msra.mxu0 0.0
    %469 = vmatprep.subr.mxu0 0.0
    %470 = vmatpush1.msra.mxu0 0.0
    %471 = vmatprep.subr.mxu0 0.0
    %472 = vmatpush1.msra.mxu0 0.0
    %473 = vmatprep.subr.mxu0 0.0
    %474 = vmatpush1.msra.mxu0 0.0
    %475 = vmatprep.subr.mxu0 0.0
    %476 = vmatpush1.msra.mxu0 0.0
    %477 = vmatprep.subr.mxu0 0.0
    %478 = vmatpush1.msra.mxu0 0.0
    %479 = vmatprep.mubr.f32.mxu0 0.0
    %v480 = vand.u32 %v40, 4294901760
    %481 = vmatmul.mubr.f32.gmra.mrb[0].mxu0 %v480
    %v482 = vpop.f32.mrb[0].mxu0
    %v483 = vadd.f32 %v392, %v482
    %v484 = vpop.f32.mrb[0].mxu0
    %485 = vmatprep.mubr.f32.mxu0 0.0
    %v486 = vand.u32 %v43, 4294901760
    %487 = vmatmul.mubr.f32.gmra.mrb[0].mxu0 %v486
    %v488 = vpop.f32.mrb[0].mxu0
    %v489 = vadd.f32 %v400, %v488
    %v490 = vpop.f32.mrb[0].mxu0
    %491 = vdwg.mxu0
    %492 = vmatprep.subr.mxu0 0.0
    %v493 = vand.u32 %v20, 4294901760
    %494 = vmatpush1.msra.mxu0 %v493
    %495 = vmatprep.subr.mxu0 0.0
    %v496 = vand.u32 %v21, 4294901760
    %497 = vmatpush1.msra.mxu0 %v496
    %498 = vmatprep.subr.mxu0 0.0
    %v499 = vand.u32 %v22, 4294901760
    %500 = vmatpush1.msra.mxu0 %v499
    %501 = vmatprep.subr.mxu0 0.0
    %v502 = vand.u32 %v23, 4294901760
    %503 = vmatpush1.msra.mxu0 %v502
    %504 = vmatprep.subr.mxu0 0.0
    %505 = vmatpush1.msra.mxu0 0.0
    %506 = vmatprep.subr.mxu0 0.0
    %507 = vmatpush1.msra.mxu0 0.0
    %508 = vmatprep.subr.mxu0 0.0
    %509 = vmatpush1.msra.mxu0 0.0
    %510 = vmatprep.subr.mxu0 0.0
    %511 = vmatpush1.msra.mxu0 0.0
    %512 = vmatprep.subr.mxu0 0.0
    %513 = vmatpush1.msra.mxu0 0.0
    %514 = vmatprep.subr.mxu0 0.0
    %515 = vmatpush1.msra.mxu0 0.0
    %516 = vmatprep.subr.mxu0 0.0
    %517 = vmatpush1.msra.mxu0 0.0
    %518 = vmatprep.subr.mxu0 0.0
    %519 = vmatpush1.msra.mxu0 0.0
    %520 = vmatprep.subr.mxu0 0.0
    %521 = vmatpush1.msra.mxu0 0.0
    %522 = vmatprep.subr.mxu0 0.0
    %523 = vmatpush1.msra.mxu0 0.0
    %524 = vmatprep.subr.mxu0 0.0
    %525 = vmatpush1.msra.mxu0 0.0
    %526 = vmatprep.subr.mxu0 0.0
    %527 = vmatpush1.msra.mxu0 0.0
    %528 = vmatprep.subr.mxu0 0.0
    %529 = vmatpush1.msra.mxu0 0.0
    %530 = vmatprep.subr.mxu0 0.0
    %531 = vmatpush1.msra.mxu0 0.0
    %532 = vmatprep.subr.mxu0 0.0
    %533 = vmatpush1.msra.mxu0 0.0
    %534 = vmatprep.subr.mxu0 0.0
    %535 = vmatpush1.msra.mxu0 0.0
    %536 = vmatprep.subr.mxu0 0.0
    %537 = vmatpush1.msra.mxu0 0.0
    %538 = vmatprep.subr.mxu0 0.0
    %539 = vmatpush1.msra.mxu0 0.0
    %540 = vmatprep.subr.mxu0 0.0
    %541 = vmatpush1.msra.mxu0 0.0
    %542 = vmatprep.subr.mxu0 0.0
    %543 = vmatpush1.msra.mxu0 0.0
    %544 = vmatprep.subr.mxu0 0.0
    %545 = vmatpush1.msra.mxu0 0.0
    %546 = vmatprep.subr.mxu0 0.0
    %547 = vmatpush1.msra.mxu0 0.0
    %548 = vmatprep.subr.mxu0 0.0
    %549 = vmatpush1.msra.mxu0 0.0
    %550 = vmatprep.subr.mxu0 0.0
    %551 = vmatpush1.msra.mxu0 0.0
    %552 = vmatprep.subr.mxu0 0.0
    %553 = vmatpush1.msra.mxu0 0.0
    %554 = vmatprep.subr.mxu0 0.0
    %555 = vmatpush1.msra.mxu0 0.0
    %556 = vmatprep.subr.mxu0 0.0
    %557 = vmatpush1.msra.mxu0 0.0
    %558 = vmatprep.subr.mxu0 0.0
    %559 = vmatpush1.msra.mxu0 0.0
    %560 = vmatprep.mubr.f32.mxu0 0.0
    %v561 = vand.u32 %v40, 4294901760
    %562 = vmatmul.mubr.f32.gmra.mrb[0].mxu0 %v561
    %v563 = vpop.f32.mrb[0].mxu0
    %v564 = vadd.f32 %v483, %v563
    %v565 = vpop.f32.mrb[0].mxu0
    %566 = vmatprep.mubr.f32.mxu0 0.0
    %v567 = vand.u32 %v43, 4294901760
    %568 = vmatmul.mubr.f32.gmra.mrb[0].mxu0 %v567
    %v569 = vpop.f32.mrb[0].mxu0
    %v570 = vadd.f32 %v489, %v569
    %v571 = vpop.f32.mrb[0].mxu0
    %572 = vdwg.mxu0
    %573 = vst [vmem:[#allocation2] sm:$0xff] %v564
    %574 = vst [vmem:[#allocation2 + $0x8] sm:$0xff] %v570
    %575 = vmax.xlane.f32.xlu0 %v564
    %v576 = vpop.xlane.xlu0 %575
    %577 = vmax.xlane.f32.xlu0 %v570
    %v578 = vpop.xlane.xlu0 %577
    %v579 = vsub.f32 %v564, %v576
    %v580 = vsub.f32 %v570, %v578
    %v581 = vmul.f32 %v579, 1.442695
    %v582 = vpow.pop %v581
    %v583 = vmul.f32 %v580, 1.442695
    %v584 = vpow.pop %v583
    %585 = vadd.xlane.f32.xlu0 %v582
    %v586 = vpop.xlane.xlu0 %585
    %587 = vadd.xlane.f32.xlu0 %v584
    %v588 = vpop.xlane.xlu0 %587
    %v589 = vlog2.pop %v586
    %v590 = vmul.f32 %v589, 0.6931472
    %v591 = vlog2.pop %v588
    %v592 = vmul.f32 %v591, 0.6931472
    %v593 = vadd.f32 %v576, %v590
    %v594 = vadd.f32 %v578, %v592
    %v595 = vld [vmem:[%s1] sm:$0xff]
    %v596 = vld [vmem:[%s1 + $0x8] sm:$0xff]
    %597 = vset.pattern.permute.xlu0 0
    %598 = vperm.xlu0 %597, %v595
    %v599 = vpop.permute.xlu0 %598
    %600 = vset.pattern.permute.xlu0 0
    %601 = vperm.xlu0 %600, %v596
    %v602 = vpop.permute.xlu0 %601
    %vm603 = vcmp.eq.s32.totalorder %v25, %v599
    %vm604 = vcmp.eq.s32.totalorder %v25, %v602
    %v605 = vsel %vm603, %v564, 0.0
    %v606 = vsel %vm604, %v570, 0.0
    %607 = vadd.xlane.f32.xlu0 %v605
    %v608 = vpop.xlane.xlu0 %607
    %609 = vadd.xlane.f32.xlu0 %v606
    %v610 = vpop.xlane.xlu0 %609
    %s611 = smul.u32 0, 16
    %v612 = vlaneseq
    %v613 = vshrl.u32 %v612, 7
    %v614 = vadd.s32 %v613, 8
    %v615 = vstv %s611
    %v616 = vadd.s32 %v615, %v613
    %v617 = vadd.s32 %v615, %v614
    %vm618 = vcmp.lt.s32.totalorder %v616, 16
    %vm619 = vcmp.lt.s32.totalorder %v617, 16
    %v620 = vsel %vm618, 1, 0
    %v621 = vsel %vm619, 1, 0
    %v622 = vcvt.s32.f32 %v620
    %v623 = vcvt.s32.f32 %v621
    %v624 = vsub.f32 %v593, %v608
    %v625 = vsub.f32 %v594, %v610
    %v626 = vmul.f32 %v624, %v622
    %v627 = vmul.f32 %v625, %v623
    %vm628 = vcmask 7168
    %v629 = vsel %vm628, %v626, 0.0
    %v630 = vsel %vm628, %v627, 0.0
    %v631 = vadd.f32 %v629, %v630
    %632 = vadd.xlane.f32.xlu0 %v631
    %v633 = vpop.xlane.xlu0 %632
    %v634 = vrot.slane %v633, 4
    %v635 = vadd.f32 %v633, %v634
    %v636 = vrot.slane %v635, 2
    %v637 = vadd.f32 %v635, %v636
    %v638 = vrot.slane %v637, 1
    %v639 = vadd.f32 %v637, %v638
    %s640 = vtos %v639
    %v641 = vstv %s640
    %vm642 = vcmask 0
    %643 = vst.msk [vmem:[#allocation4] sm:$0x1] %vm642, %v641
    // Predicated region
    $region14: #{tpu_custom_call.1} parent=1 // pred_check
      _
    $region15: #{tpu_custom_call.1} parent=1 // pred_check_branch
      %645 = sbr.rel (0) target = $region17
    $region16: #{tpu_custom_call.1} parent=1 // pred_region
      %s647 = ssub.s32 256, 256
      %648 = vsyncadd [#allocation3], %s647
      %s649 = sshll.u32 [#allocation2], 4
      %s650 = int_to_ptr.vmem [resolvable:$true] %s649
      %655 = dma.vmem_to_hbm [thread:$0]  %s650, 256, %s3, [#allocation3], 128, 128, 8
    $region17: #{tpu_custom_call.1} parent=1 // pred_fallthru
      _
    // Predicated region
    $region18: #{tpu_custom_call.1} parent=1 // pred_check
      _
    $region19: #{tpu_custom_call.1} parent=1 // pred_check_branch
      %657 = sbr.rel (0) target = $region21
    $region20: #{tpu_custom_call.1} parent=1 // pred_region
      %s659 = ssub.s32 16, 16
      %660 = vsyncadd [#allocation5], %s659
      %s662 = sshll.u32 [#allocation4], 4
      %s663 = int_to_ptr.vmem [resolvable:$true] %s662
      %665 = dma.vmem_to_hbm [thread:$0]  %s663, 16, %s4, [#allocation5]
    $region21: #{tpu_custom_call.1} parent=1 // pred_fallthru
      _
    // Predicated region
    $region22: #{tpu_custom_call.1} parent=1 // pred_check
      _
    $region23: #{tpu_custom_call.1} parent=1 // pred_check_branch
      %667 = sbr.rel (0) target = $region25
    $region24: #{tpu_custom_call.1} parent=1 // pred_region
      %668 = dma.done [#allocation3], 256
    $region25: #{tpu_custom_call.1} parent=1 // pred_fallthru
      _
    // Predicated region
    $region26: #{tpu_custom_call.1} parent=1 // pred_check
      _
    $region27: #{tpu_custom_call.1} parent=1 // pred_check_branch
      %670 = sbr.rel (0) target = $region29
    $region28: #{tpu_custom_call.1} parent=1 // pred_region
      %671 = dma.done [#allocation5], 16
    $region29: #{tpu_custom_call.1} parent=1 // pred_fallthru
      _
    %672 = vsyncpa [#allocation3], 1
    %673 = vsyncpa [#allocation5], 1

</llo_original>
